<compile_context>
chip_gen: v7x
topology: tpu7x:2x2x1
jax: 0.10.0
libtpu: 0.0.40
codegen_flags: <defaults>
</compile_context>

<pallas_src>
import functools

import jax
import jax.numpy as jnp
from jax.experimental import pallas as pl
from jax.experimental.pallas import tpu as pltpu

_LANES = 128


def _layernorm_rows_kernel(x_ref, o_ref, *, h):
    # Block: (TM, H); reduce over the lane axis. Used when H % 128 == 0
    # (already lane-dense) or as the general fallback.
    x = x_ref[...].astype(jnp.float32)
    inv_h = 1.0 / h
    inv_hm1 = (1.0 / (h - 1)) if h > 1 else float("nan")
    mean = jnp.sum(x, axis=-1, keepdims=True) * inv_h
    d = x - mean
    var = jnp.sum(d * d, axis=-1, keepdims=True) * inv_hm1
    o_ref[...] = (d * (1.0 / var)).astype(o_ref.dtype)


def _layernorm_lanedense_kernel(x_ref, o_ref, *, h, pack):
    # Block: (TM, 128); each sublane row packs `pack` = 128 // h logical rows
    # along the lane axis, so loads and stores are full-width (no masked
    # stores). Per-segment moments use static lane slices; the normalized
    # segments are reassembled with one lane concatenate for a dense store.
    x = x_ref[...].astype(jnp.float32)            # (TM, 128)
    inv_h = 1.0 / h
    inv_hm1 = (1.0 / (h - 1)) if h > 1 else float("nan")
    pieces = []
    for p in range(pack):                          # static, pack <= 16
        seg = x[:, p * h:(p + 1) * h]                           # (TM, h)
        mean = jnp.sum(seg, axis=-1, keepdims=True) * inv_h     # (TM, 1)
        d = seg - mean
        var = jnp.sum(d * d, axis=-1, keepdims=True) * inv_hm1  # (TM, 1)
        pieces.append(d * (1.0 / var))                          # exact 1/x
    o_ref[...] = jnp.concatenate(pieces, axis=-1).astype(o_ref.dtype)


def _vmem_budget():
    """(target_tile_bytes, vmem_limit_bytes), conservative for v7x by default."""
    target, limit = 4 << 20, 40 << 20          # safe on v7x (64 MiB VMEM / TC)
    try:
        cap = getattr(pltpu.get_tpu_info(), "vmem_capacity_bytes", 0)
        if cap >= (128 << 20):                  # v5e / v6e: roomier tiles
            target, limit = 8 << 20, 72 << 20
    except Exception:
        pass
    return target, limit


def _choose_tm(n_rows, row_bytes_f32, target_tile_bytes, min_grid_steps=8):
    # Largest multiple-of-8 row count whose f32 tile stays under the byte
    # target (no arbitrary row cap), then capped so the grid keeps at least
    # ~min_grid_steps steps so both v7x TensorCores get several steps.
    tm = max(8, (target_tile_bytes // max(row_bytes_f32, 1)) // 8 * 8)
    cap = max(8, pl.cdiv(pl.cdiv(n_rows, min_grid_steps), 8) * 8)
    tm = min(tm, cap)
    if tm >= n_rows:
        return int(n_rows)                      # single full-extent block
    return int(tm)


def layer_normalization(x, *, tm=None):
    B, S, H = x.shape
    n_rows = B * S
    target_tile_bytes, vmem_limit_bytes = _vmem_budget()

    # Lane-dense repack when H divides 128 and the flat element count packs
    # evenly into 128-wide rows (contiguous reshape => free view).
    pack = _LANES // H if (8 <= H < _LANES and _LANES % H == 0) else 0
    lane_dense = pack > 0 and (n_rows * H) % _LANES == 0
    # TODO(synk): H < 128 with 128 % H != 0 (or H < 8) still uses the
    # masked-store fallback; a general repacking would need gather/scatter.

    if lane_dense:
        rows, cols = (n_rows * H) // _LANES, _LANES
        kernel = functools.partial(_layernorm_lanedense_kernel, h=H, pack=pack)
    else:
        rows, cols = n_rows, H
        kernel = functools.partial(_layernorm_rows_kernel, h=H)

    x2 = x.reshape(rows, cols)
    if tm is None:
        tm = _choose_tm(rows, cols * 4, target_tile_bytes)

    grid = (pl.cdiv(rows, tm),)   # partial tail block: Pallas masks the stores

    out = pl.pallas_call(
        kernel,
        out_shape=jax.ShapeDtypeStruct((rows, cols), x.dtype),
        grid_spec=pltpu.PrefetchScalarGridSpec(
            num_scalar_prefetch=0,
            grid=grid,
            # Default double-buffering; sweep pl.Buffered(3) only if profiling
            # shows exposed DMA.
            in_specs=[pl.BlockSpec((tm, cols), lambda i: (i, 0))],
            out_specs=pl.BlockSpec((tm, cols), lambda i: (i, 0)),
        ),
        compiler_params=pltpu.CompilerParams(
            dimension_semantics=("parallel",),
            vmem_limit_bytes=vmem_limit_bytes,
        ),
    )(x2)

    return out.reshape(B, S, H)


if __name__ == "__main__":
    key = jax.random.PRNGKey(0)
    B, S, H = 2, 8, 32
    x = jax.random.normal(key, (B, S, H), dtype=jnp.float32)

    out = layer_normalization(x)
    out = jax.block_until_ready(out)

    # Pure-JAX reference (torch semantics: unbiased var, divide by variance)
    mean = jnp.mean(x, axis=2, keepdims=True)
    var = jnp.var(x, axis=2, keepdims=True, ddof=1)
    ref = (x - mean) / var
    assert jnp.allclose(out, ref, atol=1e-5, rtol=1e-5)

    print("KERNEL_OK")
</pallas_src>

<mosaic_0001>
module attributes {stable_mosaic.version = 11 : i64} {
  func.func @_layernorm_lanedense_kernel(%arg0: i32, %arg1: memref<4x128xf32, #tpu.memory_space<vmem>>, %arg2: memref<4x128xf32, #tpu.memory_space<vmem>>) attributes {dimension_semantics = [#tpu.dimension_semantics<parallel>], iteration_bounds = array<i64: 1>, scalar_prefetch = 0 : i64, scratch_operands = 0 : i64, tpu.core_type = #tpu.core_type<tc>, window_params = [{transform_indices = @transform_0, window_bounds = array<i64: 4, 128>}, {transform_indices = @transform_1, window_bounds = array<i64: 4, 128>}]} {
    %c0 = arith.constant 0 : index
    %c0_0 = arith.constant 0 : index
    %0 = vector.load %arg1[%c0, %c0_0] : memref<4x128xf32, #tpu.memory_space<vmem>>, vector<4x128xf32>
    %1 = vector.extract_strided_slice %0 {offsets = [0, 0], sizes = [4, 32], strides = [1, 1]} : vector<4x128xf32> to vector<4x32xf32>
    %cst = arith.constant dense<0.000000e+00> : vector<4xf32>
    %2 = vector.multi_reduction <add>, %1, %cst [1] : vector<4x32xf32> to vector<4xf32>
    %3 = vector.shape_cast %2 : vector<4xf32> to vector<4x1xf32>
    %cst_1 = arith.constant 3.125000e-02 : f32
    %4 = vector.broadcast %cst_1 : f32 to vector<4x1xf32>
    %5 = arith.mulf %3, %4 : vector<4x1xf32>
    %6 = vector.broadcast %5 : vector<4x1xf32> to vector<4x32xf32>
    %7 = arith.subf %1, %6 : vector<4x32xf32>
    %8 = arith.mulf %7, %7 : vector<4x32xf32>
    %cst_2 = arith.constant dense<0.000000e+00> : vector<4xf32>
    %9 = vector.multi_reduction <add>, %8, %cst_2 [1] : vector<4x32xf32> to vector<4xf32>
    %10 = vector.shape_cast %9 : vector<4xf32> to vector<4x1xf32>
    %cst_3 = arith.constant 0.0322580636 : f32
    %11 = vector.broadcast %cst_3 : f32 to vector<4x1xf32>
    %12 = arith.mulf %10, %11 : vector<4x1xf32>
    %cst_4 = arith.constant 1.000000e+00 : f32
    %13 = vector.broadcast %cst_4 : f32 to vector<4x1xf32>
    %14 = arith.divf %13, %12 : vector<4x1xf32>
    %15 = vector.broadcast %14 : vector<4x1xf32> to vector<4x32xf32>
    %16 = arith.mulf %7, %15 : vector<4x32xf32>
    %17 = vector.extract_strided_slice %0 {offsets = [0, 32], sizes = [4, 32], strides = [1, 1]} : vector<4x128xf32> to vector<4x32xf32>
    %cst_5 = arith.constant dense<0.000000e+00> : vector<4xf32>
    %18 = vector.multi_reduction <add>, %17, %cst_5 [1] : vector<4x32xf32> to vector<4xf32>
    %19 = vector.shape_cast %18 : vector<4xf32> to vector<4x1xf32>
    %cst_6 = arith.constant 3.125000e-02 : f32
    %20 = vector.broadcast %cst_6 : f32 to vector<4x1xf32>
    %21 = arith.mulf %19, %20 : vector<4x1xf32>
    %22 = vector.broadcast %21 : vector<4x1xf32> to vector<4x32xf32>
    %23 = arith.subf %17, %22 : vector<4x32xf32>
    %24 = arith.mulf %23, %23 : vector<4x32xf32>
    %cst_7 = arith.constant dense<0.000000e+00> : vector<4xf32>
    %25 = vector.multi_reduction <add>, %24, %cst_7 [1] : vector<4x32xf32> to vector<4xf32>
    %26 = vector.shape_cast %25 : vector<4xf32> to vector<4x1xf32>
    %cst_8 = arith.constant 0.0322580636 : f32
    %27 = vector.broadcast %cst_8 : f32 to vector<4x1xf32>
    %28 = arith.mulf %26, %27 : vector<4x1xf32>
    %cst_9 = arith.constant 1.000000e+00 : f32
    %29 = vector.broadcast %cst_9 : f32 to vector<4x1xf32>
    %30 = arith.divf %29, %28 : vector<4x1xf32>
    %31 = vector.broadcast %30 : vector<4x1xf32> to vector<4x32xf32>
    %32 = arith.mulf %23, %31 : vector<4x32xf32>
    %33 = vector.extract_strided_slice %0 {offsets = [0, 64], sizes = [4, 32], strides = [1, 1]} : vector<4x128xf32> to vector<4x32xf32>
    %cst_10 = arith.constant dense<0.000000e+00> : vector<4xf32>
    %34 = vector.multi_reduction <add>, %33, %cst_10 [1] : vector<4x32xf32> to vector<4xf32>
    %35 = vector.shape_cast %34 : vector<4xf32> to vector<4x1xf32>
    %cst_11 = arith.constant 3.125000e-02 : f32
    %36 = vector.broadcast %cst_11 : f32 to vector<4x1xf32>
    %37 = arith.mulf %35, %36 : vector<4x1xf32>
    %38 = vector.broadcast %37 : vector<4x1xf32> to vector<4x32xf32>
    %39 = arith.subf %33, %38 : vector<4x32xf32>
    %40 = arith.mulf %39, %39 : vector<4x32xf32>
    %cst_12 = arith.constant dense<0.000000e+00> : vector<4xf32>
    %41 = vector.multi_reduction <add>, %40, %cst_12 [1] : vector<4x32xf32> to vector<4xf32>
    %42 = vector.shape_cast %41 : vector<4xf32> to vector<4x1xf32>
    %cst_13 = arith.constant 0.0322580636 : f32
    %43 = vector.broadcast %cst_13 : f32 to vector<4x1xf32>
    %44 = arith.mulf %42, %43 : vector<4x1xf32>
    %cst_14 = arith.constant 1.000000e+00 : f32
    %45 = vector.broadcast %cst_14 : f32 to vector<4x1xf32>
    %46 = arith.divf %45, %44 : vector<4x1xf32>
    %47 = vector.broadcast %46 : vector<4x1xf32> to vector<4x32xf32>
    %48 = arith.mulf %39, %47 : vector<4x32xf32>
    %49 = vector.extract_strided_slice %0 {offsets = [0, 96], sizes = [4, 32], strides = [1, 1]} : vector<4x128xf32> to vector<4x32xf32>
    %cst_15 = arith.constant dense<0.000000e+00> : vector<4xf32>
    %50 = vector.multi_reduction <add>, %49, %cst_15 [1] : vector<4x32xf32> to vector<4xf32>
    %51 = vector.shape_cast %50 : vector<4xf32> to vector<4x1xf32>
    %cst_16 = arith.constant 3.125000e-02 : f32
    %52 = vector.broadcast %cst_16 : f32 to vector<4x1xf32>
    %53 = arith.mulf %51, %52 : vector<4x1xf32>
    %54 = vector.broadcast %53 : vector<4x1xf32> to vector<4x32xf32>
    %55 = arith.subf %49, %54 : vector<4x32xf32>
    %56 = arith.mulf %55, %55 : vector<4x32xf32>
    %cst_17 = arith.constant dense<0.000000e+00> : vector<4xf32>
    %57 = vector.multi_reduction <add>, %56, %cst_17 [1] : vector<4x32xf32> to vector<4xf32>
    %58 = vector.shape_cast %57 : vector<4xf32> to vector<4x1xf32>
    %cst_18 = arith.constant 0.0322580636 : f32
    %59 = vector.broadcast %cst_18 : f32 to vector<4x1xf32>
    %60 = arith.mulf %58, %59 : vector<4x1xf32>
    %cst_19 = arith.constant 1.000000e+00 : f32
    %61 = vector.broadcast %cst_19 : f32 to vector<4x1xf32>
    %62 = arith.divf %61, %60 : vector<4x1xf32>
    %63 = vector.broadcast %62 : vector<4x1xf32> to vector<4x32xf32>
    %64 = arith.mulf %55, %63 : vector<4x32xf32>
    %65 = tpu.concatenate %16, %32, %48, %64 in 1 : vector<4x32xf32>, vector<4x32xf32>, vector<4x32xf32>, vector<4x32xf32> -> vector<4x128xf32>
    %c0_20 = arith.constant 0 : index
    %c0_21 = arith.constant 0 : index
    %66 = vector.load %arg2[%c0_20, %c0_21] : memref<4x128xf32, #tpu.memory_space<vmem>>, vector<4x128xf32>
    tpu.vector_store %arg2[%c0_20, %c0_21], %65 {strides = array<i32>} : memref<4x128xf32, #tpu.memory_space<vmem>>, vector<4x128xf32>,
    return
  }
  func.func @transform_0(%arg0: i32) -> (i32, i32) {
    %c0_i32 = arith.constant 0 : i32
    %c0_i32_0 = arith.constant 0 : i32
    return %arg0, %c0_i32 : i32, i32
  }
  func.func @transform_1(%arg0: i32) -> (i32, i32) {
    %c0_i32 = arith.constant 0 : i32
    %c0_i32_0 = arith.constant 0 : i32
    return %arg0, %c0_i32 : i32, i32
  }
}

</mosaic_0001>

<llo_original>
// kernel: tpu_custom_call.1
$region0: #{tpu_custom_call.1}
  #allocation0 [shape = 'u32[]', space=smem, size = 0x4, offset = 0x4, fixed_abs, tag = 'smem constant byte address 0x4 - core index']
  #allocation1 [shape = 'u32[144,128]{1,0:T(1,128)}', space=vmem, size = 0x12000, scoped, tag = 'internal scratch']
  %s0 = inlined_call_operand.hbm [shape: f32[4,128], index: 0, kind: input, shape index: {}]
  %s1 = inlined_call_operand.hbm [shape: f32[4,128], index: 1, kind: output, shape index: {}]
  %s2 = sld [smem:[#allocation0]]
  $region18: #{tpu_custom_call.1} parent=0
    _
  %s4 = ssub.s32 1, %s2
  %s5 = scalar_select 0, %s4, %s2
  $region1: #{tpu_custom_call.1} parent=0
    #allocation2 [shape = 'u8[2048]{0}', space=vmem, size = 0x800, scoped, tag = 'input window, operand 0, single buffered']
    #allocation3 [shape = 's32[1]{0}', space=sflag, size = 0x4, scoped, tag = 'scoped memory for tpu_custom_call.1']
    #allocation4 [shape = 's32[1]{0}', space=sflag, size = 0x4, scoped, tag = 'scoped memory for tpu_custom_call.1']
    #allocation5 [shape = 'u8[2048]{0}', space=vmem, size = 0x800, scoped, tag = 'output window, operand 0, single buffered']
    %6 = vsyncpa [#allocation3], 0
    %7 = vsyncpa [#allocation4], 0
    // Predicated region
    $region2: #{tpu_custom_call.1} parent=1 // pred_check
      _
    $region3: #{tpu_custom_call.1} parent=1 // pred_check_branch
      %9 = sbr.rel (0) target = $region5
    $region4: #{tpu_custom_call.1} parent=1 // pred_region
      %s11 = ssub.s32 64, 64
      %12 = vsyncadd [#allocation3], %s11
      %s14 = sshll.u32 [#allocation2], 4
      %s15 = int_to_ptr.vmem [resolvable:$true] %s14
      %17 = dma.hbm_to_vmem [thread:$0]  %s0, 64, %s15, [#allocation3]
    $region5: #{tpu_custom_call.1} parent=1 // pred_fallthru
      _
    // Predicated region
    $region6: #{tpu_custom_call.1} parent=1 // pred_check
      _
    $region7: #{tpu_custom_call.1} parent=1 // pred_check_branch
      %19 = sbr.rel (0) target = $region9
    $region8: #{tpu_custom_call.1} parent=1 // pred_region
      %20 = dma.done [#allocation3], 64
    $region9: #{tpu_custom_call.1} parent=1 // pred_fallthru
      _
    %v21 = vld [vmem:[#allocation2] sm:$0xf]
    %vm22 = vcmask 257024
    %v23 = vsel %vm22, %v21, 0.0
    %24 = vadd.xlane.f32.xlu0 %v23
    %v25 = vpop.xlane.xlu0 %24
    %v26 = vmul.f32 %v25, 0.03125
    %v27 = vsub.f32 %v21, %v26
    %v28 = vmul.f32 %v27, %v27
    %v29 = vsel %vm22, %v28, 0.0
    %30 = vadd.xlane.f32.xlu0 %v29
    %v31 = vpop.xlane.xlu0 %30
    %v32 = vmul.f32 %v31, 0.032258064
    %v33 = vrcp.pop %v32
    %v34 = vmul.f32 1.0, %v33
    %v35 = vmul.f32 %v27, %v34
    %37 = vrot.lane.b32.xlu0 %v21, 96
    %v38 = vpop.permute.xlu0 %37
    %v40 = vsel %vm22, %v38, 0.0
    %41 = vadd.xlane.f32.xlu0 %v40
    %v42 = vpop.xlane.xlu0 %41
    %v43 = vmul.f32 %v42, 0.03125
    %v44 = vsub.f32 %v21, %v43
    %v45 = vmul.f32 %v44, %v44
    %47 = vrot.lane.b32.xlu0 %v45, 96
    %v48 = vpop.permute.xlu0 %47
    %v50 = vsel %vm22, %v48, 0.0
    %51 = vadd.xlane.f32.xlu0 %v50
    %v52 = vpop.xlane.xlu0 %51
    %v53 = vmul.f32 %v52, 0.032258064
    %v54 = vrcp.pop %v53
    %v55 = vmul.f32 1.0, %v54
    %v56 = vmul.f32 %v44, %v55
    %57 = vrot.lane.b32.xlu0 %v21, 64
    %v58 = vpop.permute.xlu0 %57
    %v60 = vsel %vm22, %v58, 0.0
    %61 = vadd.xlane.f32.xlu0 %v60
    %v62 = vpop.xlane.xlu0 %61
    %v63 = vmul.f32 %v62, 0.03125
    %v64 = vsub.f32 %v21, %v63
    %v65 = vmul.f32 %v64, %v64
    %67 = vrot.lane.b32.xlu0 %v65, 64
    %v68 = vpop.permute.xlu0 %67
    %v70 = vsel %vm22, %v68, 0.0
    %71 = vadd.xlane.f32.xlu0 %v70
    %v72 = vpop.xlane.xlu0 %71
    %v73 = vmul.f32 %v72, 0.032258064
    %v74 = vrcp.pop %v73
    %v75 = vmul.f32 1.0, %v74
    %v76 = vmul.f32 %v64, %v75
    %77 = vrot.lane.b32.xlu0 %v21, 32
    %v78 = vpop.permute.xlu0 %77
    %v80 = vsel %vm22, %v78, 0.0
    %81 = vadd.xlane.f32.xlu0 %v80
    %v82 = vpop.xlane.xlu0 %81
    %v83 = vmul.f32 %v82, 0.03125
    %v84 = vsub.f32 %v21, %v83
    %v85 = vmul.f32 %v84, %v84
    %87 = vrot.lane.b32.xlu0 %v85, 32
    %v88 = vpop.permute.xlu0 %87
    %v90 = vsel %vm22, %v88, 0.0
    %91 = vadd.xlane.f32.xlu0 %v90
    %v92 = vpop.xlane.xlu0 %91
    %v93 = vmul.f32 %v92, 0.032258064
    %v94 = vrcp.pop %v93
    %v95 = vmul.f32 1.0, %v94
    %v96 = vmul.f32 %v84, %v95
    %vm97 = vcmask 261120
    %v98 = vsel %vm97, %v35, %v56
    %vm99 = vcmask 523264
    %v100 = vsel %vm99, %v98, %v76
    %vm101 = vcmask 785408
    %v102 = vsel %vm101, %v100, %v96
    %103 = vst [vmem:[#allocation5] sm:$0xf] %v102
    // Predicated region
    $region10: #{tpu_custom_call.1} parent=1 // pred_check
      _
    $region11: #{tpu_custom_call.1} parent=1 // pred_check_branch
      %105 = sbr.rel (0) target = $region13
    $region12: #{tpu_custom_call.1} parent=1 // pred_region
      %s107 = ssub.s32 64, 64
      %108 = vsyncadd [#allocation4], %s107
      %s110 = sshll.u32 [#allocation5], 4
      %s111 = int_to_ptr.vmem [resolvable:$true] %s110
      %113 = dma.vmem_to_hbm [thread:$0]  %s111, 64, %s1, [#allocation4]
    $region13: #{tpu_custom_call.1} parent=1 // pred_fallthru
      _
    // Predicated region
    $region14: #{tpu_custom_call.1} parent=1 // pred_check
      _
    $region15: #{tpu_custom_call.1} parent=1 // pred_check_branch
      %115 = sbr.rel (0) target = $region17
    $region16: #{tpu_custom_call.1} parent=1 // pred_region
      %116 = dma.done [#allocation4], 64
    $region17: #{tpu_custom_call.1} parent=1 // pred_fallthru
      _
    %117 = vsyncpa [#allocation3], 1
    %118 = vsyncpa [#allocation4], 1

</llo_original>
